<compile_context>
chip_gen: v7x
topology: tpu7x:2x2x1
jax: 0.10.0
libtpu: 0.0.40
codegen_flags: <defaults>
</compile_context>

<pallas_src>
import jax
import jax.numpy as jnp
from jax import lax
from jax.experimental import pallas as pl
from jax.experimental.pallas import tpu as pltpu

_BN_EPS = 1e-5                          # nn.BatchNorm2d default eps
_SMALL_CIN = 16                         # <=: VPU broadcast-MAC conv


def _vmem_budgets():
    """(scoped vmem limit, tile working-set budget) per TPU generation."""
    try:
        cap = int(pltpu.get_tpu_info().vmem_capacity_bytes)
    except Exception:
        cap = 64 * 1024 * 1024          # conservative fallback (v7x-sized VMEM)
    vmem_limit = (cap * 3) // 4         # 96 MiB on v5e/v6e, 48 MiB on v7x
    tile_budget = cap // 2              # 64 MiB on v5e/v6e, 32 MiB on v7x
    return vmem_limit, tile_budget


def _conv1x1(w, x):
    """1x1 conv as (Co, Ci) @ (Ci, T) -> (Co, T) in f32.

    Tiny contraction dims leave the MXU ~97% idle, so small-channel convs are
    an unrolled VPU broadcast-multiply-accumulate; larger channel counts use
    the MXU matmul with f32 accumulation.
    """
    _, cin = w.shape
    if cin <= _SMALL_CIN:
        wf = w.astype(jnp.float32)
        xf = x.astype(jnp.float32)
        y = wf[:, 0:1] * xf[0:1, :]
        for ci in range(1, cin):
            y = y + wf[:, ci:ci + 1] * xf[ci:ci + 1, :]
        return y
    # TODO(synk): on v5e (197 TF/s MXU) cast w (and x if precision allows) to
    # bf16 for very large cin*cout so the twice-run conv stays bandwidth-bound.
    return jnp.dot(w, x, preferred_element_type=jnp.float32)


def _ppm_stats_kernel(x_ref, w_ref, sum_ref, ssq_ref):
    """Sweep 1: per-batch partial sum / sum-of-squares of y = W @ x.

    The accumulator block is indexed by grid axis 0 (batch), so axis 0 is
    'parallel' (megacore-shardable) and only axis 1 carries the reduction.
    """
    @pl.when(pl.program_id(1) == 0)
    def _init():
        sum_ref[...] = jnp.zeros_like(sum_ref)
        ssq_ref[...] = jnp.zeros_like(ssq_ref)

    y = _conv1x1(w_ref[...], x_ref[...])                    # (Cout, T) f32
    sum_ref[...] += jnp.sum(y, axis=-1, keepdims=True)
    ssq_ref[...] += jnp.sum(y * y, axis=-1, keepdims=True)


def _ppm_apply_split_kernel(x_ref, w_ref, scale_ref, shift_ref, o_ref):
    """Sweep 2 (fused concat): o[:cin] = x ; o[cin:] = ReLU(conv(x)*s + b).

    For cin % 8 == 0 both sub-stores are sublane-aligned, unmasked stores; the
    passthrough rows do no VPU affine/MAC work at all.
    """
    cin = x_ref.shape[0]
    x = x_ref[...]
    o_ref[0:cin, :] = x.astype(o_ref.dtype)                 # concat fused here
    z = _conv1x1(w_ref[...], x)                             # (Cout, T) f32
    o_ref[cin:, :] = jnp.maximum(
        z * scale_ref[...] + shift_ref[...], 0.0).astype(o_ref.dtype)


def _ppm_apply_aug_kernel(x_ref, w_ref, scale_ref, shift_ref, lb_ref, o_ref):
    """Sweep 2 (fused concat, non-8-aligned small cin): single full-tile store.

    Augmented weight [[I]; [W]]: passthrough rows use scale=1, shift=0,
    lb=-inf (no ReLU on x); conv rows use the folded BN affine and lb=0.
    """
    z = _conv1x1(w_ref[...], x_ref[...])                    # (Cin+Cout, T) f32
    out = jnp.maximum(z * scale_ref[...] + shift_ref[...], lb_ref[...])
    o_ref[...] = out.astype(o_ref.dtype)


def _pick_tile_hw(hw_pad, bytes_per_col, fixed_bytes, budget):
    """Largest multiple-of-128 divisor of hw_pad whose double-buffered working
    set (per-column bytes * tile + fixed operand bytes) fits the budget."""
    avail = budget - fixed_bytes
    cap_cols = max(128, avail // max(bytes_per_col, 1))
    if hw_pad <= cap_cols:
        return hw_pad
    best, t = 128, 256
    limit = min(hw_pad, int(cap_cols))
    while t <= limit:
        if hw_pad % t == 0:
            best = t
        t += 128
    return best


def naive_ppm_forward(x, conv_weight, bn_gamma, bn_beta):
    """x: (N, Cin, H, W); conv_weight: (Cout, Cin, 1, 1); returns
    (N, Cin + Cout, H, W), matching NaivePyramidPoolingModule.forward
    (training-mode BatchNorm, biased batch variance)."""
    n, cin, h, w = x.shape
    cout = conv_weight.shape[0]
    ctot = cin + cout
    hw = h * w
    p = n * hw                                   # valid pixel count for BN
    itemsize = jnp.dtype(x.dtype).itemsize

    vmem_limit, tile_budget = _vmem_budgets()

    x3 = x.reshape(n, cin, hw)                   # free reshape, no transpose
    w_mat = conv_weight.reshape(cout, cin)

    # Pad H*W up to a lane multiple so every block is lane-dense.  Padded
    # columns are zero -> conv(0) = 0 -> they add nothing to sum/ssq.
    hw_pad = ((hw + 127) // 128) * 128
    if hw_pad != hw:
        x3 = jnp.pad(x3, ((0, 0), (0, 0), (0, hw_pad - hw)))

    def _rep(shape):                             # small replicated operand
        return pl.BlockSpec(shape, lambda i, j: (0,) * len(shape))

    # ---------------- sweep 1: per-batch partial BN statistics --------------
    # Working set per lane-column: only the (double-buffered) x block; the
    # double-buffered weight is charged as a fixed cost.
    stats_fixed = 2 * cout * cin * 4
    stats_tile = _pick_tile_hw(hw_pad, 2 * cin * itemsize, stats_fixed,
                               tile_budget)
    stats_grid = (n, hw_pad // stats_tile)

    psum, pssq = pl.pallas_call(
        _ppm_stats_kernel,
        out_shape=(jax.ShapeDtypeStruct((n, cout, 1), jnp.float32),
                   jax.ShapeDtypeStruct((n, cout, 1), jnp.float32)),
        grid=stats_grid,
        in_specs=[pl.BlockSpec((None, cin, stats_tile), lambda i, j: (i, 0, j)),
                  _rep((cout, cin))],
        out_specs=(pl.BlockSpec((None, cout, 1), lambda i, j: (i, 0, 0)),
                   pl.BlockSpec((None, cout, 1), lambda i, j: (i, 0, 0))),
        compiler_params=pltpu.CompilerParams(
            dimension_semantics=("parallel", "arbitrary"),
            vmem_limit_bytes=vmem_limit),
    )(x3, w_mat)

    # Reduce the tiny per-batch partials and fold BN into per-channel
    # scale/shift in plain JAX.
    # TODO(synk): E[y^2]-E[y]^2 in f32 degrades for very large N*H*W or large
    # |mean|; switch to a centered second stats pass for huge inputs.
    stat_sum = jnp.sum(psum, axis=0)                            # (Cout, 1)
    stat_ssq = jnp.sum(pssq, axis=0)
    mean = stat_sum / p
    var = stat_ssq / p - mean * mean
    inv_std = lax.rsqrt(var + _BN_EPS)
    scale = bn_gamma.reshape(cout, 1).astype(jnp.float32) * inv_std
    shift = bn_beta.reshape(cout, 1).astype(jnp.float32) - mean * scale

    # ---------------- sweep 2: fused conv+BN+ReLU+concat --------------------
    use_augmented = (cin % 8 != 0) and (cin <= _SMALL_CIN)
    w_rows = ctot if use_augmented else cout
    apply_bpc = 2 * cin * itemsize + 2 * ctot * itemsize       # x in + cat out
    apply_fixed = 2 * (w_rows * cin * 4 + 3 * w_rows * 4)      # weight + affine
    apply_tile = _pick_tile_hw(hw_pad, apply_bpc, apply_fixed, tile_budget)
    apply_grid = (n, hw_pad // apply_tile)

    x_spec = pl.BlockSpec((None, cin, apply_tile), lambda i, j: (i, 0, j))
    o_spec = pl.BlockSpec((None, ctot, apply_tile), lambda i, j: (i, 0, j))
    apply_params = pltpu.CompilerParams(
        dimension_semantics=("parallel", "parallel"),   # shards over v7x 2 TCs
        vmem_limit_bytes=vmem_limit)

    if use_augmented:
        eye = jnp.eye(cin, dtype=jnp.float32)
        w_aug = jnp.concatenate([eye, w_mat.astype(jnp.float32)], axis=0)
        scale_aug = jnp.concatenate(
            [jnp.ones((cin, 1), jnp.float32), scale], axis=0)
        shift_aug = jnp.concatenate(
            [jnp.zeros((cin, 1), jnp.float32), shift], axis=0)
        lb_aug = jnp.concatenate(
            [jnp.full((cin, 1), -jnp.inf, jnp.float32),
             jnp.zeros((cout, 1), jnp.float32)], axis=0)
        out3 = pl.pallas_call(
            _ppm_apply_aug_kernel,
            out_shape=jax.ShapeDtypeStruct((n, ctot, hw_pad), x.dtype),
            grid=apply_grid,
            in_specs=[x_spec, _rep((ctot, cin)), _rep((ctot, 1)),
                      _rep((ctot, 1)), _rep((ctot, 1))],
            out_specs=o_spec,
            compiler_params=apply_params,
        )(x3, w_aug, scale_aug, shift_aug, lb_aug)
    else:
        out3 = pl.pallas_call(
            _ppm_apply_split_kernel,
            out_shape=jax.ShapeDtypeStruct((n, ctot, hw_pad), x.dtype),
            grid=apply_grid,
            in_specs=[x_spec, _rep((cout, cin)), _rep((cout, 1)),
                      _rep((cout, 1))],
            out_specs=o_spec,
            compiler_params=apply_params,
        )(x3, w_mat, scale, shift)

    if hw_pad != hw:
        out3 = out3[:, :, :hw]

    # F.interpolate(feature, (H, W), bilinear, align_corners=True) with output
    # size == input size is the identity map, so no resampling is needed.
    return out3.reshape(n, ctot, h, w)


def _reference(x, conv_weight, bn_gamma, bn_beta):
    """Pure-JAX reference mirroring the PyTorch forward (training-mode BN)."""
    cout = conv_weight.shape[0]
    cin = conv_weight.shape[1]
    y = jnp.einsum("nchw,oc->nohw", x, conv_weight.reshape(cout, cin),
                   precision=lax.Precision.HIGHEST)
    mean = jnp.mean(y, axis=(0, 2, 3), keepdims=True)
    var = jnp.mean((y - mean) ** 2, axis=(0, 2, 3), keepdims=True)
    yn = (y - mean) * lax.rsqrt(var + _BN_EPS)
    yn = yn * bn_gamma.reshape(1, cout, 1, 1) + bn_beta.reshape(1, cout, 1, 1)
    feat = jnp.maximum(yn, 0.0)
    return jnp.concatenate([x, feat], axis=1)


if __name__ == "__main__":
    import numpy as np

    fwd = jax.jit(naive_ppm_forward)

    def _check(n, cin, cout, h, w, tol):
        key = jax.random.PRNGKey(0)
        kx, kw, kg, kb = jax.random.split(key, 4)
        xx = jax.random.normal(kx, (n, cin, h, w), dtype=jnp.float32)
        cw = 0.1 * jax.random.normal(kw, (cout, cin, 1, 1), dtype=jnp.float32)
        g = 1.0 + 0.05 * jax.random.normal(kg, (cout,), dtype=jnp.float32)
        b = 0.05 * jax.random.normal(kb, (cout,), dtype=jnp.float32)
        out = jax.block_until_ready(fwd(xx, cw, g, b))
        assert out.shape == (n, cin + cout, h, w), out.shape
        ref = jax.block_until_ready(_reference(xx, cw, g, b))
        np.testing.assert_allclose(np.asarray(out), np.asarray(ref),
                                   rtol=tol, atol=tol)

    # Main case implied by the module: batch=2, in_dim=4, reduction_dim=4, 16x16
    # (small non-8-aligned cin -> augmented-weight single-store path).
    _check(2, 4, 4, 16, 16, 1e-5)
    # cin % 8 == 0 -> fused-concat split-store path (aligned sub-stores, VPU conv).
    _check(2, 8, 8, 16, 16, 1e-5)
    # cin > 16 (MXU conv) with H*W not a lane multiple (padded to 128).
    # Looser tolerance: the MXU f32 matmul runs at default (bf16-pass) precision.
    _check(1, 32, 8, 10, 10, 2e-2)

    print("KERNEL_OK")
</pallas_src>

<mosaic_0001>
module attributes {stable_mosaic.version = 11 : i64} {
  func.func @_ppm_stats_kernel(%arg0: i32, %arg1: i32, %arg2: memref<1x4x256xf32, #tpu.memory_space<vmem>>, %arg3: memref<4x4xf32, #tpu.memory_space<vmem>>, %arg4: memref<1x4x1xf32, #tpu.memory_space<vmem>>, %arg5: memref<1x4x1xf32, #tpu.memory_space<vmem>>) attributes {dimension_semantics = [#tpu.dimension_semantics<parallel>, #tpu.dimension_semantics<arbitrary>], iteration_bounds = array<i64: 2, 1>, scalar_prefetch = 0 : i64, scratch_operands = 0 : i64, tpu.core_type = #tpu.core_type<tc>, window_params = [{transform_indices = @transform_0, window_bounds = array<i64: 1, 4, 256>}, {pipeline_mode = #tpu.pipeline_mode<synchronous>, transform_indices = @transform_1, window_bounds = array<i64: 4, 4>}, {transform_indices = @transform_2, window_bounds = array<i64: 1, 4, 1>}, {transform_indices = @transform_3, window_bounds = array<i64: 1, 4, 1>}]} {
    %c0_i32 = arith.constant 0 : i32
    %0 = arith.cmpi eq, %arg1, %c0_i32 : i32
    %1 = arith.extui %0 : i1 to i32
    %c0_i32_0 = arith.constant 0 : i32
    %2 = arith.cmpi ne, %1, %c0_i32_0 : i32
    scf.if %2 {
      %cst_18 = arith.constant 0.000000e+00 : f32
      %46 = vector.broadcast %cst_18 : f32 to vector<4x1xf32>
      %c0_19 = arith.constant 0 : index
      %c0_20 = arith.constant 0 : index
      %c0_21 = arith.constant 0 : index
      %47 = vector.load %arg4[%c0_19, %c0_20, %c0_21] : memref<1x4x1xf32, #tpu.memory_space<vmem>>, vector<1x4x1xf32>
      %48 = vector.shape_cast %47 : vector<1x4x1xf32> to vector<4x1xf32>
      %49 = vector.shape_cast %46 : vector<4x1xf32> to vector<1x4x1xf32>
      tpu.vector_store %arg4[%c0_19, %c0_20, %c0_21], %49 {strides = array<i32>} : memref<1x4x1xf32, #tpu.memory_space<vmem>>, vector<1x4x1xf32>,
      %cst_22 = arith.constant 0.000000e+00 : f32
      %50 = vector.broadcast %cst_22 : f32 to vector<4x1xf32>
      %c0_23 = arith.constant 0 : index
      %c0_24 = arith.constant 0 : index
      %c0_25 = arith.constant 0 : index
      %51 = vector.load %arg5[%c0_23, %c0_24, %c0_25] : memref<1x4x1xf32, #tpu.memory_space<vmem>>, vector<1x4x1xf32>
      %52 = vector.shape_cast %51 : vector<1x4x1xf32> to vector<4x1xf32>
      %53 = vector.shape_cast %50 : vector<4x1xf32> to vector<1x4x1xf32>
      tpu.vector_store %arg5[%c0_23, %c0_24, %c0_25], %53 {strides = array<i32>} : memref<1x4x1xf32, #tpu.memory_space<vmem>>, vector<1x4x1xf32>,
    } else {
    }
    %c0 = arith.constant 0 : index
    %c0_1 = arith.constant 0 : index
    %3 = vector.load %arg3[%c0, %c0_1] : memref<4x4xf32, #tpu.memory_space<vmem>>, vector<4x4xf32>
    %c0_2 = arith.constant 0 : index
    %c0_3 = arith.constant 0 : index
    %c0_4 = arith.constant 0 : index
    %4 = vector.load %arg2[%c0_2, %c0_3, %c0_4] : memref<1x4x256xf32, #tpu.memory_space<vmem>>, vector<1x4x256xf32>
    %5 = vector.shape_cast %4 : vector<1x4x256xf32> to vector<4x256xf32>
    %6 = vector.extract_strided_slice %3 {offsets = [0, 0], sizes = [4, 1], strides = [1, 1]} : vector<4x4xf32> to vector<4x1xf32>
    %7 = vector.extract_strided_slice %5 {offsets = [0, 0], sizes = [1, 256], strides = [1, 1]} : vector<4x256xf32> to vector<1x256xf32>
    %8 = vector.broadcast %6 : vector<4x1xf32> to vector<4x256xf32>
    %9 = vector.broadcast %7 : vector<1x256xf32> to vector<4x256xf32>
    %10 = arith.mulf %8, %9 : vector<4x256xf32>
    %11 = vector.extract_strided_slice %3 {offsets = [0, 1], sizes = [4, 1], strides = [1, 1]} : vector<4x4xf32> to vector<4x1xf32>
    %12 = vector.extract_strided_slice %5 {offsets = [1, 0], sizes = [1, 256], strides = [1, 1]} : vector<4x256xf32> to vector<1x256xf32>
    %13 = vector.broadcast %11 : vector<4x1xf32> to vector<4x256xf32>
    %14 = vector.broadcast %12 : vector<1x256xf32> to vector<4x256xf32>
    %15 = arith.mulf %13, %14 : vector<4x256xf32>
    %16 = arith.addf %10, %15 : vector<4x256xf32>
    %17 = vector.extract_strided_slice %3 {offsets = [0, 2], sizes = [4, 1], strides = [1, 1]} : vector<4x4xf32> to vector<4x1xf32>
    %18 = vector.extract_strided_slice %5 {offsets = [2, 0], sizes = [1, 256], strides = [1, 1]} : vector<4x256xf32> to vector<1x256xf32>
    %19 = vector.broadcast %17 : vector<4x1xf32> to vector<4x256xf32>
    %20 = vector.broadcast %18 : vector<1x256xf32> to vector<4x256xf32>
    %21 = arith.mulf %19, %20 : vector<4x256xf32>
    %22 = arith.addf %16, %21 : vector<4x256xf32>
    %23 = vector.extract_strided_slice %3 {offsets = [0, 3], sizes = [4, 1], strides = [1, 1]} : vector<4x4xf32> to vector<4x1xf32>
    %24 = vector.extract_strided_slice %5 {offsets = [3, 0], sizes = [1, 256], strides = [1, 1]} : vector<4x256xf32> to vector<1x256xf32>
    %25 = vector.broadcast %23 : vector<4x1xf32> to vector<4x256xf32>
    %26 = vector.broadcast %24 : vector<1x256xf32> to vector<4x256xf32>
    %27 = arith.mulf %25, %26 : vector<4x256xf32>
    %28 = arith.addf %22, %27 : vector<4x256xf32>
    %c0_5 = arith.constant 0 : index
    %c0_6 = arith.constant 0 : index
    %c0_7 = arith.constant 0 : index
    %29 = vector.load %arg4[%c0_5, %c0_6, %c0_7] : memref<1x4x1xf32, #tpu.memory_space<vmem>>, vector<1x4x1xf32>
    %30 = vector.shape_cast %29 : vector<1x4x1xf32> to vector<4x1xf32>
    %cst = arith.constant dense<0.000000e+00> : vector<4xf32>
    %31 = vector.multi_reduction <add>, %28, %cst [1] : vector<4x256xf32> to vector<4xf32>
    %32 = vector.shape_cast %31 : vector<4xf32> to vector<4x1xf32>
    %33 = arith.addf %30, %32 : vector<4x1xf32>
    %c0_8 = arith.constant 0 : index
    %c0_9 = arith.constant 0 : index
    %c0_10 = arith.constant 0 : index
    %34 = vector.load %arg4[%c0_8, %c0_9, %c0_10] : memref<1x4x1xf32, #tpu.memory_space<vmem>>, vector<1x4x1xf32>
    %35 = vector.shape_cast %34 : vector<1x4x1xf32> to vector<4x1xf32>
    %36 = vector.shape_cast %33 : vector<4x1xf32> to vector<1x4x1xf32>
    tpu.vector_store %arg4[%c0_8, %c0_9, %c0_10], %36 {strides = array<i32>} : memref<1x4x1xf32, #tpu.memory_space<vmem>>, vector<1x4x1xf32>,
    %c0_11 = arith.constant 0 : index
    %c0_12 = arith.constant 0 : index
    %c0_13 = arith.constant 0 : index
    %37 = vector.load %arg5[%c0_11, %c0_12, %c0_13] : memref<1x4x1xf32, #tpu.memory_space<vmem>>, vector<1x4x1xf32>
    %38 = vector.shape_cast %37 : vector<1x4x1xf32> to vector<4x1xf32>
    %39 = arith.mulf %28, %28 : vector<4x256xf32>
    %cst_14 = arith.constant dense<0.000000e+00> : vector<4xf32>
    %40 = vector.multi_reduction <add>, %39, %cst_14 [1] : vector<4x256xf32> to vector<4xf32>
    %41 = vector.shape_cast %40 : vector<4xf32> to vector<4x1xf32>
    %42 = arith.addf %38, %41 : vector<4x1xf32>
    %c0_15 = arith.constant 0 : index
    %c0_16 = arith.constant 0 : index
    %c0_17 = arith.constant 0 : index
    %43 = vector.load %arg5[%c0_15, %c0_16, %c0_17] : memref<1x4x1xf32, #tpu.memory_space<vmem>>, vector<1x4x1xf32>
    %44 = vector.shape_cast %43 : vector<1x4x1xf32> to vector<4x1xf32>
    %45 = vector.shape_cast %42 : vector<4x1xf32> to vector<1x4x1xf32>
    tpu.vector_store %arg5[%c0_15, %c0_16, %c0_17], %45 {strides = array<i32>} : memref<1x4x1xf32, #tpu.memory_space<vmem>>, vector<1x4x1xf32>,
    return
  }
  func.func @transform_0(%arg0: i32, %arg1: i32) -> (i32, i32, i32) {
    %c0_i32 = arith.constant 0 : i32
    %c0_i32_0 = arith.constant 0 : i32
    return %arg0, %c0_i32, %arg1 : i32, i32, i32
  }
  func.func @transform_1(%arg0: i32, %arg1: i32) -> (i32, i32) {
    %c0_i32 = arith.constant 0 : i32
    %c0_i32_0 = arith.constant 0 : i32
    %c0_i32_1 = arith.constant 0 : i32
    return %c0_i32, %c0_i32_0 : i32, i32
  }
  func.func @transform_2(%arg0: i32, %arg1: i32) -> (i32, i32, i32) {
    %c0_i32 = arith.constant 0 : i32
    %c0_i32_0 = arith.constant 0 : i32
    %c0_i32_1 = arith.constant 0 : i32
    return %arg0, %c0_i32, %c0_i32_0 : i32, i32, i32
  }
  func.func @transform_3(%arg0: i32, %arg1: i32) -> (i32, i32, i32) {
    %c0_i32 = arith.constant 0 : i32
    %c0_i32_0 = arith.constant 0 : i32
    %c0_i32_1 = arith.constant 0 : i32
    return %arg0, %c0_i32, %c0_i32_0 : i32, i32, i32
  }
}

module attributes {stable_mosaic.version = 11 : i64} {
  func.func @_ppm_apply_aug_kernel(%arg0: i32, %arg1: i32, %arg2: memref<1x4x256xf32, #tpu.memory_space<vmem>>, %arg3: memref<8x4xf32, #tpu.memory_space<vmem>>, %arg4: memref<8x1xf32, #tpu.memory_space<vmem>>, %arg5: memref<8x1xf32, #tpu.memory_space<vmem>>, %arg6: memref<8x1xf32, #tpu.memory_space<vmem>>, %arg7: memref<1x8x256xf32, #tpu.memory_space<vmem>>) attributes {dimension_semantics = [#tpu.dimension_semantics<parallel>, #tpu.dimension_semantics<parallel>], iteration_bounds = array<i64: 2, 1>, scalar_prefetch = 0 : i64, scratch_operands = 0 : i64, tpu.core_type = #tpu.core_type<tc>, window_params = [{transform_indices = @transform_0, window_bounds = array<i64: 1, 4, 256>}, {pipeline_mode = #tpu.pipeline_mode<synchronous>, transform_indices = @transform_1, window_bounds = array<i64: 8, 4>}, {pipeline_mode = #tpu.pipeline_mode<synchronous>, transform_indices = @transform_2, window_bounds = array<i64: 8, 1>}, {pipeline_mode = #tpu.pipeline_mode<synchronous>, transform_indices = @transform_3, window_bounds = array<i64: 8, 1>}, {pipeline_mode = #tpu.pipeline_mode<synchronous>, transform_indices = @transform_4, window_bounds = array<i64: 8, 1>}, {transform_indices = @transform_5, window_bounds = array<i64: 1, 8, 256>}]} {
    %c0 = arith.constant 0 : index
    %c0_0 = arith.constant 0 : index
    %0 = vector.load %arg3[%c0, %c0_0] : memref<8x4xf32, #tpu.memory_space<vmem>>, vector<8x4xf32>
    %c0_1 = arith.constant 0 : index
    %c0_2 = arith.constant 0 : index
    %c0_3 = arith.constant 0 : index
    %1 = vector.load %arg2[%c0_1, %c0_2, %c0_3] : memref<1x4x256xf32, #tpu.memory_space<vmem>>, vector<1x4x256xf32>
    %2 = vector.shape_cast %1 : vector<1x4x256xf32> to vector<4x256xf32>
    %3 = vector.extract_strided_slice %0 {offsets = [0, 0], sizes = [8, 1], strides = [1, 1]} : vector<8x4xf32> to vector<8x1xf32>
    %4 = vector.extract_strided_slice %2 {offsets = [0, 0], sizes = [1, 256], strides = [1, 1]} : vector<4x256xf32> to vector<1x256xf32>
    %5 = vector.broadcast %3 : vector<8x1xf32> to vector<8x256xf32>
    %6 = vector.broadcast %4 : vector<1x256xf32> to vector<8x256xf32>
    %7 = arith.mulf %5, %6 : vector<8x256xf32>
    %8 = vector.extract_strided_slice %0 {offsets = [0, 1], sizes = [8, 1], strides = [1, 1]} : vector<8x4xf32> to vector<8x1xf32>
    %9 = vector.extract_strided_slice %2 {offsets = [1, 0], sizes = [1, 256], strides = [1, 1]} : vector<4x256xf32> to vector<1x256xf32>
    %10 = vector.broadcast %8 : vector<8x1xf32> to vector<8x256xf32>
    %11 = vector.broadcast %9 : vector<1x256xf32> to vector<8x256xf32>
    %12 = arith.mulf %10, %11 : vector<8x256xf32>
    %13 = arith.addf %7, %12 : vector<8x256xf32>
    %14 = vector.extract_strided_slice %0 {offsets = [0, 2], sizes = [8, 1], strides = [1, 1]} : vector<8x4xf32> to vector<8x1xf32>
    %15 = vector.extract_strided_slice %2 {offsets = [2, 0], sizes = [1, 256], strides = [1, 1]} : vector<4x256xf32> to vector<1x256xf32>
    %16 = vector.broadcast %14 : vector<8x1xf32> to vector<8x256xf32>
    %17 = vector.broadcast %15 : vector<1x256xf32> to vector<8x256xf32>
    %18 = arith.mulf %16, %17 : vector<8x256xf32>
    %19 = arith.addf %13, %18 : vector<8x256xf32>
    %20 = vector.extract_strided_slice %0 {offsets = [0, 3], sizes = [8, 1], strides = [1, 1]} : vector<8x4xf32> to vector<8x1xf32>
    %21 = vector.extract_strided_slice %2 {offsets = [3, 0], sizes = [1, 256], strides = [1, 1]} : vector<4x256xf32> to vector<1x256xf32>
    %22 = vector.broadcast %20 : vector<8x1xf32> to vector<8x256xf32>
    %23 = vector.broadcast %21 : vector<1x256xf32> to vector<8x256xf32>
    %24 = arith.mulf %22, %23 : vector<8x256xf32>
    %25 = arith.addf %19, %24 : vector<8x256xf32>
    %c0_4 = arith.constant 0 : index
    %c0_5 = arith.constant 0 : index
    %26 = vector.load %arg4[%c0_4, %c0_5] : memref<8x1xf32, #tpu.memory_space<vmem>>, vector<8x1xf32>
    %27 = vector.broadcast %26 : vector<8x1xf32> to vector<8x256xf32>
    %28 = arith.mulf %25, %27 : vector<8x256xf32>
    %c0_6 = arith.constant 0 : index
    %c0_7 = arith.constant 0 : index
    %29 = vector.load %arg5[%c0_6, %c0_7] : memref<8x1xf32, #tpu.memory_space<vmem>>, vector<8x1xf32>
    %30 = vector.broadcast %29 : vector<8x1xf32> to vector<8x256xf32>
    %31 = arith.addf %28, %30 : vector<8x256xf32>
    %c0_8 = arith.constant 0 : index
    %c0_9 = arith.constant 0 : index
    %32 = vector.load %arg6[%c0_8, %c0_9] : memref<8x1xf32, #tpu.memory_space<vmem>>, vector<8x1xf32>
    %33 = vector.broadcast %32 : vector<8x1xf32> to vector<8x256xf32>
    %34 = arith.maximumf %31, %33 : vector<8x256xf32>
    %c0_10 = arith.constant 0 : index
    %c0_11 = arith.constant 0 : index
    %c0_12 = arith.constant 0 : index
    %35 = vector.load %arg7[%c0_10, %c0_11, %c0_12] : memref<1x8x256xf32, #tpu.memory_space<vmem>>, vector<1x8x256xf32>
    %36 = vector.shape_cast %35 : vector<1x8x256xf32> to vector<8x256xf32>
    %37 = vector.shape_cast %34 : vector<8x256xf32> to vector<1x8x256xf32>
    tpu.vector_store %arg7[%c0_10, %c0_11, %c0_12], %37 {strides = array<i32>} : memref<1x8x256xf32, #tpu.memory_space<vmem>>, vector<1x8x256xf32>,
    return
  }
  func.func @transform_0(%arg0: i32, %arg1: i32) -> (i32, i32, i32) {
    %c0_i32 = arith.constant 0 : i32
    %c0_i32_0 = arith.constant 0 : i32
    return %arg0, %c0_i32, %arg1 : i32, i32, i32
  }
  func.func @transform_1(%arg0: i32, %arg1: i32) -> (i32, i32) {
    %c0_i32 = arith.constant 0 : i32
    %c0_i32_0 = arith.constant 0 : i32
    %c0_i32_1 = arith.constant 0 : i32
    return %c0_i32, %c0_i32_0 : i32, i32
  }
  func.func @transform_2(%arg0: i32, %arg1: i32) -> (i32, i32) {
    %c0_i32 = arith.constant 0 : i32
    %c0_i32_0 = arith.constant 0 : i32
    %c0_i32_1 = arith.constant 0 : i32
    return %c0_i32, %c0_i32_0 : i32, i32
  }
  func.func @transform_3(%arg0: i32, %arg1: i32) -> (i32, i32) {
    %c0_i32 = arith.constant 0 : i32
    %c0_i32_0 = arith.constant 0 : i32
    %c0_i32_1 = arith.constant 0 : i32
    return %c0_i32, %c0_i32_0 : i32, i32
  }
  func.func @transform_4(%arg0: i32, %arg1: i32) -> (i32, i32) {
    %c0_i32 = arith.constant 0 : i32
    %c0_i32_0 = arith.constant 0 : i32
    %c0_i32_1 = arith.constant 0 : i32
    return %c0_i32, %c0_i32_0 : i32, i32
  }
  func.func @transform_5(%arg0: i32, %arg1: i32) -> (i32, i32, i32) {
    %c0_i32 = arith.constant 0 : i32
    %c0_i32_0 = arith.constant 0 : i32
    return %arg0, %c0_i32, %arg1 : i32, i32, i32
  }
}

</mosaic_0001>

<llo_original>
// kernel: naive_ppm_forward.2
$region0: #{naive_ppm_forward.2}
  #allocation0 [shape = 'u32[]', space=smem, size = 0x4, offset = 0x4, fixed_abs, tag = 'smem constant byte address 0x4 - core index']
  #allocation1 [shape = 'u32[144,128]{1,0:T(1,128)}', space=vmem, size = 0x12000, scoped, tag = 'internal scratch']
  %s0 = inlined_call_operand.vmem [shape: f32[2,4,256], index: 0, kind: input, shape index: {}]
  %s1 = inlined_call_operand.vmem [shape: f32[4,4], index: 1, kind: input, shape index: {}]
  %s2 = inlined_call_operand.vmem [shape: f32[2,4,1], index: 2, kind: output, shape index: {0}]
  %s3 = inlined_call_operand.vmem [shape: f32[2,4,1], index: 3, kind: output, shape index: {1}]
  %4 = xla_tuple %s2, %s3
  %s5 = sld [smem:[#allocation0]]
  $region53: #{naive_ppm_forward.2} parent=0
    _
  %s7 = ssub.s32 1, %s5
  %s8 = scalar_select 0, %s7, %s5
  loop: start=0, step=1, limit=4
  $region2: #{naive_ppm_forward.2} parent=0 // loop_pre_header
    _
  $region3: #{naive_ppm_forward.2} parent=0 // loop_header
    %s10 = sphi 0, %s14
    %p11 = scmp.ge.s32.totalorder %s10, 4
    %s17 = sphi 0, %s29
    %s18 = sphi 0, %s25
    %s19 = sphi 0, %s17
    %s20 = sphi 0, %s18
    %s21 = sphi 0, %s19
    %s22 = sphi 0, %s20
    %s34 = sphi 0, %s36
    %s37 = sphi 0, %s34
    %s38 = sphi 0, %s37
    %s54 = sphi 0, %s38
    %s58 = sphi 0, %s58
    %s60 = sphi 0, %s58
    %s61 = sphi 0, %s60
    %s75 = sphi 0, %s61
    %s81 = sphi 0, %s83
    %s84 = sphi 0, %s81
    %s85 = sphi 0, %s84
    %s101 = sphi 0, %s85
    %s107 = sphi 0, %s109
    %s110 = sphi 0, %s107
    %s111 = sphi 0, %s110
    %s127 = sphi 0, %s111
  $region4: #{naive_ppm_forward.2} parent=0 // loop_header_branch
    %13 = sbr.rel (%p11) target = $region8
  $region5: #{naive_ppm_forward.2} parent=0 // loop_body
    %s15 = ssub.s32 %s10, 1
    %s16 = ssub.s32 %s10, 2
    %s23 = sadd.s32 1, %s18
    %p24 = scmp.ge.s32.totalorder %s23, 1
    %s25 = scalar_select %p24, 0, %s23
    %s26 = sadd.s32 1, %s17
    %s27 = scalar_select %p24, %s26, %s17
    %p28 = scmp.ge.s32.totalorder %s27, 2
    %s29 = scalar_select %p28, 0, %s27
    %s30 = ssub.s32 %s17, %s29
    %s31 = ssub.s32 %s18, %s25
    %s32 = sor.u32 %s30, %s31
    %p33 = scmp.eq.s32.totalorder %s32, 0
    %s35 = sadd.s32 %s34, 1
    %s36 = scalar_select %p33, %s34, %s35
    %p39 = pneg %p33
    %p40 = scmp.eq.s32.totalorder %s10, 1
    %p41 = por %p39, %p40
    %p42 = scmp.ne.s32.totalorder %s34, %s37
    %p43 = scmp.eq.s32.totalorder %s10, 0
    %p44 = por %p42, %p43
    %p45 = scmp.ne.s32.totalorder %s34, %s37
    %p46 = scmp.eq.s32.totalorder %s15, 1
    %p47 = por %p45, %p46
    %p48 = scmp.ne.s32.totalorder %s37, %s38
    %p49 = scmp.eq.s32.totalorder %s15, 0
    %p50 = por %p48, %p49
    %p51 = scmp.ne.s32.totalorder %s37, %s38
    %p52 = scmp.eq.s32.totalorder %s16, 1
    %p53 = por %p51, %p52
    %p55 = scmp.ne.s32.totalorder %s38, %s54
    %p56 = scmp.eq.s32.totalorder %s16, 0
    %p57 = por %p55, %p56
    %s59 = sadd.s32 %s58, 1
    %p62 = scmp.eq.s32.totalorder %s10, 1
    %p63 = scmp.ne.s32.totalorder %s58, %s60
    %p64 = scmp.eq.s32.totalorder %s10, 0
    %p65 = por %p63, %p64
    %p66 = scmp.ne.s32.totalorder %s58, %s60
    %p67 = scmp.eq.s32.totalorder %s15, 1
    %p68 = por %p66, %p67
    %p69 = scmp.ne.s32.totalorder %s60, %s61
    %p70 = scmp.eq.s32.totalorder %s15, 0
    %p71 = por %p69, %p70
    %p72 = scmp.ne.s32.totalorder %s60, %s61
    %p73 = scmp.eq.s32.totalorder %s16, 1
    %p74 = por %p72, %p73
    %p76 = scmp.ne.s32.totalorder %s61, %s75
    %p77 = scmp.eq.s32.totalorder %s16, 0
    %p78 = por %p76, %p77
    %s79 = ssub.s32 %s17, %s29
    %p80 = scmp.eq.s32.totalorder %s79, 0
    %s82 = sadd.s32 %s81, 1
    %s83 = scalar_select %p80, %s81, %s82
    %p86 = pneg %p80
    %p87 = scmp.eq.s32.totalorder %s10, 1
    %p88 = por %p86, %p87
    %p89 = scmp.ne.s32.totalorder %s81, %s84
    %p90 = scmp.eq.s32.totalorder %s10, 0
    %p91 = por %p89, %p90
    %p92 = scmp.ne.s32.totalorder %s81, %s84
    %p93 = scmp.eq.s32.totalorder %s15, 1
    %p94 = por %p92, %p93
    %p95 = scmp.ne.s32.totalorder %s84, %s85
    %p96 = scmp.eq.s32.totalorder %s15, 0
    %p97 = por %p95, %p96
    %p98 = scmp.ne.s32.totalorder %s84, %s85
    %p99 = scmp.eq.s32.totalorder %s16, 1
    %p100 = por %p98, %p99
    %p102 = scmp.ne.s32.totalorder %s85, %s101
    %p103 = scmp.eq.s32.totalorder %s16, 0
    %p104 = por %p102, %p103
    %s105 = ssub.s32 %s17, %s29
    %p106 = scmp.eq.s32.totalorder %s105, 0
    %s108 = sadd.s32 %s107, 1
    %s109 = scalar_select %p106, %s107, %s108
    %p112 = pneg %p106
    %p113 = scmp.eq.s32.totalorder %s10, 1
    %p114 = por %p112, %p113
    %p115 = scmp.ne.s32.totalorder %s107, %s110
    %p116 = scmp.eq.s32.totalorder %s10, 0
    %p117 = por %p115, %p116
    %p118 = scmp.ne.s32.totalorder %s107, %s110
    %p119 = scmp.eq.s32.totalorder %s15, 1
    %p120 = por %p118, %p119
    %p121 = scmp.ne.s32.totalorder %s110, %s111
    %p122 = scmp.eq.s32.totalorder %s15, 0
    %p123 = por %p121, %p122
    %p124 = scmp.ne.s32.totalorder %s110, %s111
    %p125 = scmp.eq.s32.totalorder %s16, 1
    %p126 = por %p124, %p125
    %p128 = scmp.ne.s32.totalorder %s111, %s127
    %p129 = scmp.eq.s32.totalorder %s16, 0
    %p130 = por %p128, %p129
    %p131 = scmp.le.s32.totalorder 1, %s10
    %p132 = scmp.lt.s32.totalorder %s10, 3
    %p133 = pnand %p131, %p132
    %p134 = pneg %p133
    // Predicated region
    $region9: #{naive_ppm_forward.2} parent=5 // pred_check
      _
    $region10: #{naive_ppm_forward.2} parent=5 // pred_check_branch
      %136 = sbr.rel (%p133) target = $region12
    $region11: #{naive_ppm_forward.2} parent=5 // pred_region
      %s137 = ssub.s32 %s10, 1
      // Predicated region
      $region13: #{naive_ppm_forward.2} parent=11 // pred_check
        %p138 = pneg %p71
      $region14: #{naive_ppm_forward.2} parent=11 // pred_check_branch
        %140 = sbr.rel (%p138) target = $region16
      $region15: #{naive_ppm_forward.2} parent=11 // pred_region
        _
      $region16: #{naive_ppm_forward.2} parent=11 // pred_fallthru
        _
    $region12: #{naive_ppm_forward.2} parent=5 // pred_fallthru
      _
    %p141 = scmp.lt.s32.totalorder %s10, 2
    // Predicated region
    $region17: #{naive_ppm_forward.2} parent=5 // pred_check
      %p142 = pneg %p141
    $region18: #{naive_ppm_forward.2} parent=5 // pred_check_branch
      %144 = sbr.rel (%p142) target = $region20
    $region19: #{naive_ppm_forward.2} parent=5 // pred_region
      // Predicated region
      $region21: #{naive_ppm_forward.2} parent=19 // pred_check
        %p145 = pneg %p44
      $region22: #{naive_ppm_forward.2} parent=19 // pred_check_branch
        %147 = sbr.rel (%p145) target = $region24
      $region23: #{naive_ppm_forward.2} parent=19 // pred_region
        %s148 = smul.u32 2, %s18
        %p149 = scmp.lt.s32.totalorder %s17, 1
        %s150 = scalar_select %p149, %s17, 1
        %p151 = scmp.lt.s32.totalorder %s148, 1
        %s152 = scalar_select %p151, %s148, 1
        %s153 = smul.addr %s150, 2
        %s154 = sadd.s32 %s152, %s153
        %s155 = smul.addr %s154, 4
        %s156 = scalar_lea.vmem %s0, %s155
        %s157 = smul.u32 2, %s18
      $region24: #{naive_ppm_forward.2} parent=19 // pred_fallthru
        _
    $region20: #{naive_ppm_forward.2} parent=5 // pred_fallthru
      _
    %p158 = scmp.le.s32.totalorder 1, %s10
    %p159 = scmp.lt.s32.totalorder %s10, 3
    %p160 = pnand %p158, %p159
    %p161 = pneg %p160
    // Predicated region
    $region25: #{naive_ppm_forward.2} parent=5 // pred_check
      _
    $region26: #{naive_ppm_forward.2} parent=5 // pred_check_branch
      %163 = sbr.rel (%p160) target = $region28
    $region27: #{naive_ppm_forward.2} parent=5 // pred_region
      %s164 = ssub.s32 %s10, 1
      %s165 = smul.u32 2, %s20
      %p166 = scmp.lt.s32.totalorder %s19, 1
      %s167 = scalar_select %p166, %s19, 1
      %p168 = scmp.lt.s32.totalorder %s165, 1
      %s169 = scalar_select %p168, %s165, 1
      %s170 = smul.addr %s167, 2
      %s171 = sadd.s32 %s169, %s170
      %s172 = smul.addr %s171, 4
      %s173 = scalar_lea.vmem %s0, %s172
      %p174 = pneg %p50
      %p175 = pneg %p47
      %p176 = pneg %p71
      %p177 = pneg %p68
      %p178 = pneg %p97
      %p179 = pneg %p94
      %p180 = scmp.lt.s32.totalorder %s19, 1
      %s181 = scalar_select %p180, %s19, 1
      %s182 = smul.addr %s181, 4
      %s183 = scalar_lea.vmem %s2, %s182
      %p184 = pneg %p123
      %p185 = pneg %p120
      %p186 = scmp.lt.s32.totalorder %s19, 1
      %s187 = scalar_select %p186, %s19, 1
      %s188 = smul.addr %s187, 4
      %s189 = scalar_lea.vmem %s3, %s188
      %s190 = smul.u32 2, %s20
      %p191 = scmp.lt.s32.totalorder %s19, 1
      %s192 = scalar_select %p191, %s19, 1
      %p193 = scmp.lt.s32.totalorder %s190, 1
      %s194 = scalar_select %p193, %s190, 1
      %s195 = smul.addr %s192, 2
      %s196 = sadd.s32 %s194, %s195
      %s197 = smul.addr %s196, 4
      %s198 = scalar_lea.vmem %s0, %s197
      %s199 = smul.u32 2, %s20
      %p200 = scmp.lt.s32.totalorder %s19, 1
      %s201 = scalar_select %p200, %s19, 1
      %s202 = smul.addr %s201, 4
      %s203 = scalar_lea.vmem %s2, %s202
      %p204 = scmp.lt.s32.totalorder %s19, 1
      %s205 = scalar_select %p204, %s19, 1
      %s206 = smul.addr %s205, 4
      %s207 = scalar_lea.vmem %s3, %s206
      %p208 = scmp.eq.s32.totalorder %s20, 0
      // Predicated region
      $region29: #{naive_ppm_forward.2} parent=27 // pred_check
        %p209 = pneg %p208
      $region30: #{naive_ppm_forward.2} parent=27 // pred_check_branch
        %211 = sbr.rel (%p209) target = $region32
      $region31: #{naive_ppm_forward.2} parent=27 // pred_region
        %vm212 = vcmask 3072
        %213 = vst.msk [vmem:[%s203] sm:$0xf] %vm212, 0.0
        %214 = vst.msk [vmem:[%s207] sm:$0xf] %vm212, 0.0
      $region32: #{naive_ppm_forward.2} parent=27 // pred_fallthru
        _
      %v215 = vld [vmem:[%s1] sm:$0xf]
      %v216 = vld [vmem:[%s198] sm:$0xff]
      %218 = vset.pattern.permute.xlu0 0
      %219 = vperm.xlu0 %218, %v215
      %v220 = vpop.permute.xlu0 %219
      %v223 = vlaneseq
      %v224 = vshrl.u32 %v223, 7
      %v225 = vsub.s32 0, %v224
      %v226 = vrot.slane %v216, %v225
      %v227 = vlaneseq
      %v228 = vshrl.u32 %v227, 7
      %v229 = vsub.s32 4, %v228
      %v230 = vrot.slane %v216, %v229
      %v233 = vlaneseq
      %v234 = vshrl.u32 %v233, 7
      %v235 = vsub.s32 0, %v234
      %v236 = vrot.slane %v226, %v235
      %v237 = vlaneseq
      %v238 = vshrl.u32 %v237, 7
      %v239 = vsub.s32 0, %v238
      %v240 = vrot.slane %v230, %v239
      %v241 = vmul.f32 %v220, %v236
      %v242 = vmul.f32 %v220, %v240
      %243 = vset.pattern.permute.xlu0 1
      %244 = vperm.xlu0 %243, %v215
      %v245 = vpop.permute.xlu0 %244
      %v247 = vlaneseq
      %v248 = vshrl.u32 %v247, 7
      %v249 = vsub.s32 1, %v248
      %v250 = vrot.slane %v216, %v249
      %v251 = vlaneseq
      %v252 = vshrl.u32 %v251, 7
      %v253 = vsub.s32 5, %v252
      %v254 = vrot.slane %v216, %v253
      %v257 = vlaneseq
      %v258 = vshrl.u32 %v257, 7
      %v259 = vsub.s32 1, %v258
      %v260 = vrot.slane %v250, %v259
      %v261 = vlaneseq
      %v262 = vshrl.u32 %v261, 7
      %v263 = vsub.s32 1, %v262
      %v264 = vrot.slane %v254, %v263
      %v265 = vmul.f32 %v245, %v260
      %v266 = vmul.f32 %v245, %v264
      %v267 = vadd.f32 %v241, %v265
      %v268 = vadd.f32 %v242, %v266
      %269 = vset.pattern.permute.xlu0 2
      %270 = vperm.xlu0 %269, %v215
      %v271 = vpop.permute.xlu0 %270
      %v273 = vlaneseq
      %v274 = vshrl.u32 %v273, 7
      %v275 = vsub.s32 2, %v274
      %v276 = vrot.slane %v216, %v275
      %v277 = vlaneseq
      %v278 = vshrl.u32 %v277, 7
      %v279 = vsub.s32 6, %v278
      %v280 = vrot.slane %v216, %v279
      %v283 = vlaneseq
      %v284 = vshrl.u32 %v283, 7
      %v285 = vsub.s32 2, %v284
      %v286 = vrot.slane %v276, %v285
      %v287 = vlaneseq
      %v288 = vshrl.u32 %v287, 7
      %v289 = vsub.s32 2, %v288
      %v290 = vrot.slane %v280, %v289
      %v291 = vmul.f32 %v271, %v286
      %v292 = vmul.f32 %v271, %v290
      %v293 = vadd.f32 %v267, %v291
      %v294 = vadd.f32 %v268, %v292
      %295 = vset.pattern.permute.xlu0 3
      %296 = vperm.xlu0 %295, %v215
      %v297 = vpop.permute.xlu0 %296
      %v299 = vlaneseq
      %v300 = vshrl.u32 %v299, 7
      %v301 = vsub.s32 3, %v300
      %v302 = vrot.slane %v216, %v301
      %v303 = vlaneseq
      %v304 = vshrl.u32 %v303, 7
      %v305 = vsub.s32 7, %v304
      %v306 = vrot.slane %v216, %v305
      %v309 = vlaneseq
      %v310 = vshrl.u32 %v309, 7
      %v311 = vsub.s32 3, %v310
      %v312 = vrot.slane %v302, %v311
      %v313 = vlaneseq
      %v314 = vshrl.u32 %v313, 7
      %v315 = vsub.s32 3, %v314
      %v316 = vrot.slane %v306, %v315
      %v317 = vmul.f32 %v297, %v312
      %v318 = vmul.f32 %v297, %v316
      %v319 = vadd.f32 %v293, %v317
      %v320 = vadd.f32 %v294, %v318
      %v321 = vld [vmem:[%s203] sm:$0xf]
      %vm322 = vcmask 1043456
      %v323 = vsel %vm322, %v319, 0.0
      %v324 = vsel %vm322, %v320, 0.0
      %v325 = vadd.f32 %v323, %v324
      %326 = vadd.xlane.f32.xlu0 %v325
      %v327 = vpop.xlane.xlu0 %326
      %v328 = vadd.f32 %v321, %v327
      %vm329 = vcmask 3072
      %330 = vst.msk [vmem:[%s203] sm:$0xf] %vm329, %v328
      %v331 = vld [vmem:[%s207] sm:$0xf]
      %v332 = vmul.f32 %v319, %v319
      %v333 = vmul.f32 %v320, %v320
      %v334 = vsel %vm322, %v332, 0.0
      %v335 = vsel %vm322, %v333, 0.0
      %v336 = vadd.f32 %v334, %v335
      %337 = vadd.xlane.f32.xlu0 %v336
      %v338 = vpop.xlane.xlu0 %337
      %v339 = vadd.f32 %v331, %v338
      %340 = vst.msk [vmem:[%s207] sm:$0xf] %vm329, %v339
      %p341 = scmp.lt.s32.totalorder %s19, 1
      %s342 = scalar_select %p341, %s19, 1
      %s343 = smul.addr %s342, 4
      %s344 = scalar_lea.vmem %s2, %s343
      %p345 = scmp.lt.s32.totalorder %s19, 1
      %s346 = scalar_select %p345, %s19, 1
      %s347 = smul.addr %s346, 4
      %s348 = scalar_lea.vmem %s3, %s347
      // Predicated region
      $region33: #{naive_ppm_forward.2} parent=27 // pred_check
        %p349 = pneg %p94
      $region34: #{naive_ppm_forward.2} parent=27 // pred_check_branch
        %351 = sbr.rel (%p349) target = $region36
      $region35: #{naive_ppm_forward.2} parent=27 // pred_region
        _
      $region36: #{naive_ppm_forward.2} parent=27 // pred_fallthru
        _
      // Predicated region
      $region37: #{naive_ppm_forward.2} parent=27 // pred_check
        %p352 = pneg %p120
      $region38: #{naive_ppm_forward.2} parent=27 // pred_check_branch
        %354 = sbr.rel (%p352) target = $region40
      $region39: #{naive_ppm_forward.2} parent=27 // pred_region
        _
      $region40: #{naive_ppm_forward.2} parent=27 // pred_fallthru
        _
    $region28: #{naive_ppm_forward.2} parent=5 // pred_fallthru
      _
    %p355 = scmp.le.s32.totalorder 2, %s10
    // Predicated region
    $region41: #{naive_ppm_forward.2} parent=5 // pred_check
      %p356 = pneg %p355
    $region42: #{naive_ppm_forward.2} parent=5 // pred_check_branch
      %358 = sbr.rel (%p356) target = $region44
    $region43: #{naive_ppm_forward.2} parent=5 // pred_region
      %s359 = ssub.s32 %s10, 2
      // Predicated region
      $region45: #{naive_ppm_forward.2} parent=43 // pred_check
        %p360 = pneg %p100
      $region46: #{naive_ppm_forward.2} parent=43 // pred_check_branch
        %362 = sbr.rel (%p360) target = $region48
      $region47: #{naive_ppm_forward.2} parent=43 // pred_region
        %p363 = scmp.lt.s32.totalorder %s21, 1
        %s364 = scalar_select %p363, %s21, 1
        %s365 = smul.addr %s364, 4
        %s366 = scalar_lea.vmem %s2, %s365
      $region48: #{naive_ppm_forward.2} parent=43 // pred_fallthru
        _
      // Predicated region
      $region49: #{naive_ppm_forward.2} parent=43 // pred_check
        %p367 = pneg %p126
      $region50: #{naive_ppm_forward.2} parent=43 // pred_check_branch
        %369 = sbr.rel (%p367) target = $region52
      $region51: #{naive_ppm_forward.2} parent=43 // pred_region
        %p370 = scmp.lt.s32.totalorder %s21, 1
        %s371 = scalar_select %p370, %s21, 1
        %s372 = smul.addr %s371, 4
        %s373 = scalar_lea.vmem %s3, %s372
      $region52: #{naive_ppm_forward.2} parent=43 // pred_fallthru
        _
    $region44: #{naive_ppm_forward.2} parent=5 // pred_fallthru
      _
  $region6: #{naive_ppm_forward.2} parent=0 // loop_footer
    %s14 = sadd.s32 1, %s10
  $region7: #{naive_ppm_forward.2} parent=0 // loop_footer_branch
    %9 = sbr.rel target = $region3
  $region8: #{naive_ppm_forward.2} parent=0 // loop_exit
    _

// kernel: naive_ppm_forward.3
$region0: #{naive_ppm_forward.3}
  #allocation0 [shape = 'u32[]', space=smem, size = 0x4, offset = 0x4, fixed_abs, tag = 'smem constant byte address 0x4 - core index']
  #allocation1 [shape = 'u32[144,128]{1,0:T(1,128)}', space=vmem, size = 0x12000, scoped, tag = 'internal scratch']
  %s0 = inlined_call_operand.vmem [shape: f32[2,4,256], index: 0, kind: input, shape index: {}]
  %s1 = inlined_call_operand.vmem [shape: f32[8,4], index: 1, kind: input, shape index: {}]
  %s2 = inlined_call_operand.vmem [shape: f32[8,1], index: 2, kind: input, shape index: {}]
  %s3 = inlined_call_operand.vmem [shape: f32[8,1], index: 3, kind: input, shape index: {}]
  %s4 = inlined_call_operand.vmem [shape: f32[8,1], index: 4, kind: input, shape index: {}]
  %s5 = inlined_call_operand.vmem [shape: f32[2,8,256], index: 5, kind: output, shape index: {}]
  %s6 = sld [smem:[#allocation0]]
  $region53: #{naive_ppm_forward.3} parent=0
    _
  %s8 = ssub.s32 1, %s6
  %s9 = scalar_select 0, %s8, %s6
  loop: start=0, step=1, limit=4
  $region2: #{naive_ppm_forward.3} parent=0 // loop_pre_header
    _
  $region3: #{naive_ppm_forward.3} parent=0 // loop_header
    %s11 = sphi 0, %s15
    %p12 = scmp.ge.s32.totalorder %s11, 4
    %s18 = sphi 0, %s30
    %s19 = sphi 0, %s26
    %s20 = sphi 0, %s18
    %s21 = sphi 0, %s19
    %s22 = sphi 0, %s20
    %s23 = sphi 0, %s21
    %s35 = sphi 0, %s37
    %s38 = sphi 0, %s35
    %s39 = sphi 0, %s38
    %s55 = sphi 0, %s39
    %s59 = sphi 0, %s59
    %s61 = sphi 0, %s59
    %s62 = sphi 0, %s61
    %s76 = sphi 0, %s62
    %s80 = sphi 0, %s80
    %s82 = sphi 0, %s80
    %s83 = sphi 0, %s82
    %s97 = sphi 0, %s83
    %s101 = sphi 0, %s101
    %s103 = sphi 0, %s101
    %s104 = sphi 0, %s103
    %s118 = sphi 0, %s104
    %s122 = sphi 0, %s122
    %s124 = sphi 0, %s122
    %s125 = sphi 0, %s124
    %s139 = sphi 0, %s125
    %s147 = sphi 0, %s149
    %s150 = sphi 0, %s147
    %s151 = sphi 0, %s150
    %s167 = sphi 0, %s151
  $region4: #{naive_ppm_forward.3} parent=0 // loop_header_branch
    %14 = sbr.rel (%p12) target = $region8
  $region5: #{naive_ppm_forward.3} parent=0 // loop_body
    %s16 = ssub.s32 %s11, 1
    %s17 = ssub.s32 %s11, 2
    %s24 = sadd.s32 1, %s19
    %p25 = scmp.ge.s32.totalorder %s24, 1
    %s26 = scalar_select %p25, 0, %s24
    %s27 = sadd.s32 1, %s18
    %s28 = scalar_select %p25, %s27, %s18
    %p29 = scmp.ge.s32.totalorder %s28, 2
    %s30 = scalar_select %p29, 0, %s28
    %s31 = ssub.s32 %s18, %s30
    %s32 = ssub.s32 %s19, %s26
    %s33 = sor.u32 %s31, %s32
    %p34 = scmp.eq.s32.totalorder %s33, 0
    %s36 = sadd.s32 %s35, 1
    %s37 = scalar_select %p34, %s35, %s36
    %p40 = pneg %p34
    %p41 = scmp.eq.s32.totalorder %s11, 1
    %p42 = por %p40, %p41
    %p43 = scmp.ne.s32.totalorder %s35, %s38
    %p44 = scmp.eq.s32.totalorder %s11, 0
    %p45 = por %p43, %p44
    %p46 = scmp.ne.s32.totalorder %s35, %s38
    %p47 = scmp.eq.s32.totalorder %s16, 1
    %p48 = por %p46, %p47
    %p49 = scmp.ne.s32.totalorder %s38, %s39
    %p50 = scmp.eq.s32.totalorder %s16, 0
    %p51 = por %p49, %p50
    %p52 = scmp.ne.s32.totalorder %s38, %s39
    %p53 = scmp.eq.s32.totalorder %s17, 1
    %p54 = por %p52, %p53
    %p56 = scmp.ne.s32.totalorder %s39, %s55
    %p57 = scmp.eq.s32.totalorder %s17, 0
    %p58 = por %p56, %p57
    %s60 = sadd.s32 %s59, 1
    %p63 = scmp.eq.s32.totalorder %s11, 1
    %p64 = scmp.ne.s32.totalorder %s59, %s61
    %p65 = scmp.eq.s32.totalorder %s11, 0
    %p66 = por %p64, %p65
    %p67 = scmp.ne.s32.totalorder %s59, %s61
    %p68 = scmp.eq.s32.totalorder %s16, 1
    %p69 = por %p67, %p68
    %p70 = scmp.ne.s32.totalorder %s61, %s62
    %p71 = scmp.eq.s32.totalorder %s16, 0
    %p72 = por %p70, %p71
    %p73 = scmp.ne.s32.totalorder %s61, %s62
    %p74 = scmp.eq.s32.totalorder %s17, 1
    %p75 = por %p73, %p74
    %p77 = scmp.ne.s32.totalorder %s62, %s76
    %p78 = scmp.eq.s32.totalorder %s17, 0
    %p79 = por %p77, %p78
    %s81 = sadd.s32 %s80, 1
    %p84 = scmp.eq.s32.totalorder %s11, 1
    %p85 = scmp.ne.s32.totalorder %s80, %s82
    %p86 = scmp.eq.s32.totalorder %s11, 0
    %p87 = por %p85, %p86
    %p88 = scmp.ne.s32.totalorder %s80, %s82
    %p89 = scmp.eq.s32.totalorder %s16, 1
    %p90 = por %p88, %p89
    %p91 = scmp.ne.s32.totalorder %s82, %s83
    %p92 = scmp.eq.s32.totalorder %s16, 0
    %p93 = por %p91, %p92
    %p94 = scmp.ne.s32.totalorder %s82, %s83
    %p95 = scmp.eq.s32.totalorder %s17, 1
    %p96 = por %p94, %p95
    %p98 = scmp.ne.s32.totalorder %s83, %s97
    %p99 = scmp.eq.s32.totalorder %s17, 0
    %p100 = por %p98, %p99
    %s102 = sadd.s32 %s101, 1
    %p105 = scmp.eq.s32.totalorder %s11, 1
    %p106 = scmp.ne.s32.totalorder %s101, %s103
    %p107 = scmp.eq.s32.totalorder %s11, 0
    %p108 = por %p106, %p107
    %p109 = scmp.ne.s32.totalorder %s101, %s103
    %p110 = scmp.eq.s32.totalorder %s16, 1
    %p111 = por %p109, %p110
    %p112 = scmp.ne.s32.totalorder %s103, %s104
    %p113 = scmp.eq.s32.totalorder %s16, 0
    %p114 = por %p112, %p113
    %p115 = scmp.ne.s32.totalorder %s103, %s104
    %p116 = scmp.eq.s32.totalorder %s17, 1
    %p117 = por %p115, %p116
    %p119 = scmp.ne.s32.totalorder %s104, %s118
    %p120 = scmp.eq.s32.totalorder %s17, 0
    %p121 = por %p119, %p120
    %s123 = sadd.s32 %s122, 1
    %p126 = scmp.eq.s32.totalorder %s11, 1
    %p127 = scmp.ne.s32.totalorder %s122, %s124
    %p128 = scmp.eq.s32.totalorder %s11, 0
    %p129 = por %p127, %p128
    %p130 = scmp.ne.s32.totalorder %s122, %s124
    %p131 = scmp.eq.s32.totalorder %s16, 1
    %p132 = por %p130, %p131
    %p133 = scmp.ne.s32.totalorder %s124, %s125
    %p134 = scmp.eq.s32.totalorder %s16, 0
    %p135 = por %p133, %p134
    %p136 = scmp.ne.s32.totalorder %s124, %s125
    %p137 = scmp.eq.s32.totalorder %s17, 1
    %p138 = por %p136, %p137
    %p140 = scmp.ne.s32.totalorder %s125, %s139
    %p141 = scmp.eq.s32.totalorder %s17, 0
    %p142 = por %p140, %p141
    %s143 = ssub.s32 %s18, %s30
    %s144 = ssub.s32 %s19, %s26
    %s145 = sor.u32 %s143, %s144
    %p146 = scmp.eq.s32.totalorder %s145, 0
    %s148 = sadd.s32 %s147, 1
    %s149 = scalar_select %p146, %s147, %s148
    %p152 = pneg %p146
    %p153 = scmp.eq.s32.totalorder %s11, 1
    %p154 = por %p152, %p153
    %p155 = scmp.ne.s32.totalorder %s147, %s150
    %p156 = scmp.eq.s32.totalorder %s11, 0
    %p157 = por %p155, %p156
    %p158 = scmp.ne.s32.totalorder %s147, %s150
    %p159 = scmp.eq.s32.totalorder %s16, 1
    %p160 = por %p158, %p159
    %p161 = scmp.ne.s32.totalorder %s150, %s151
    %p162 = scmp.eq.s32.totalorder %s16, 0
    %p163 = por %p161, %p162
    %p164 = scmp.ne.s32.totalorder %s150, %s151
    %p165 = scmp.eq.s32.totalorder %s17, 1
    %p166 = por %p164, %p165
    %p168 = scmp.ne.s32.totalorder %s151, %s167
    %p169 = scmp.eq.s32.totalorder %s17, 0
    %p170 = por %p168, %p169
    %p171 = scmp.le.s32.totalorder 1, %s11
    %p172 = scmp.lt.s32.totalorder %s11, 3
    %p173 = pnand %p171, %p172
    %p174 = pneg %p173
    // Predicated region
    $region9: #{naive_ppm_forward.3} parent=5 // pred_check
      _
    $region10: #{naive_ppm_forward.3} parent=5 // pred_check_branch
      %176 = sbr.rel (%p173) target = $region12
    $region11: #{naive_ppm_forward.3} parent=5 // pred_region
      %s177 = ssub.s32 %s11, 1
      // Predicated region
      $region13: #{naive_ppm_forward.3} parent=11 // pred_check
        %p178 = pneg %p72
      $region14: #{naive_ppm_forward.3} parent=11 // pred_check_branch
        %180 = sbr.rel (%p178) target = $region16
      $region15: #{naive_ppm_forward.3} parent=11 // pred_region
        _
      $region16: #{naive_ppm_forward.3} parent=11 // pred_fallthru
        _
      // Predicated region
      $region17: #{naive_ppm_forward.3} parent=11 // pred_check
        %p181 = pneg %p93
      $region18: #{naive_ppm_forward.3} parent=11 // pred_check_branch
        %183 = sbr.rel (%p181) target = $region20
      $region19: #{naive_ppm_forward.3} parent=11 // pred_region
        _
      $region20: #{naive_ppm_forward.3} parent=11 // pred_fallthru
        _
      // Predicated region
      $region21: #{naive_ppm_forward.3} parent=11 // pred_check
        %p184 = pneg %p114
      $region22: #{naive_ppm_forward.3} parent=11 // pred_check_branch
        %186 = sbr.rel (%p184) target = $region24
      $region23: #{naive_ppm_forward.3} parent=11 // pred_region
        _
      $region24: #{naive_ppm_forward.3} parent=11 // pred_fallthru
        _
      // Predicated region
      $region25: #{naive_ppm_forward.3} parent=11 // pred_check
        %p187 = pneg %p135
      $region26: #{naive_ppm_forward.3} parent=11 // pred_check_branch
        %189 = sbr.rel (%p187) target = $region28
      $region27: #{naive_ppm_forward.3} parent=11 // pred_region
        _
      $region28: #{naive_ppm_forward.3} parent=11 // pred_fallthru
        _
    $region12: #{naive_ppm_forward.3} parent=5 // pred_fallthru
      _
    %p190 = scmp.lt.s32.totalorder %s11, 2
    // Predicated region
    $region29: #{naive_ppm_forward.3} parent=5 // pred_check
      %p191 = pneg %p190
    $region30: #{naive_ppm_forward.3} parent=5 // pred_check_branch
      %193 = sbr.rel (%p191) target = $region32
    $region31: #{naive_ppm_forward.3} parent=5 // pred_region
      // Predicated region
      $region33: #{naive_ppm_forward.3} parent=31 // pred_check
        %p194 = pneg %p45
      $region34: #{naive_ppm_forward.3} parent=31 // pred_check_branch
        %196 = sbr.rel (%p194) target = $region36
      $region35: #{naive_ppm_forward.3} parent=31 // pred_region
        %s197 = smul.u32 2, %s19
        %p198 = scmp.lt.s32.totalorder %s18, 1
        %s199 = scalar_select %p198, %s18, 1
        %p200 = scmp.lt.s32.totalorder %s197, 1
        %s201 = scalar_select %p200, %s197, 1
        %s202 = smul.addr %s199, 2
        %s203 = sadd.s32 %s201, %s202
        %s204 = smul.addr %s203, 4
        %s205 = scalar_lea.vmem %s0, %s204
        %s206 = smul.u32 2, %s19
      $region36: #{naive_ppm_forward.3} parent=31 // pred_fallthru
        _
    $region32: #{naive_ppm_forward.3} parent=5 // pred_fallthru
      _
    %p207 = scmp.le.s32.totalorder 1, %s11
    %p208 = scmp.lt.s32.totalorder %s11, 3
    %p209 = pnand %p207, %p208
    %p210 = pneg %p209
    // Predicated region
    $region37: #{naive_ppm_forward.3} parent=5 // pred_check
      _
    $region38: #{naive_ppm_forward.3} parent=5 // pred_check_branch
      %212 = sbr.rel (%p209) target = $region40
    $region39: #{naive_ppm_forward.3} parent=5 // pred_region
      %s213 = ssub.s32 %s11, 1
      %s214 = smul.u32 2, %s21
      %p215 = scmp.lt.s32.totalorder %s20, 1
      %s216 = scalar_select %p215, %s20, 1
      %p217 = scmp.lt.s32.totalorder %s214, 1
      %s218 = scalar_select %p217, %s214, 1
      %s219 = smul.addr %s216, 2
      %s220 = sadd.s32 %s218, %s219
      %s221 = smul.addr %s220, 4
      %s222 = scalar_lea.vmem %s0, %s221
      %p223 = pneg %p51
      %p224 = pneg %p48
      %p225 = pneg %p72
      %p226 = pneg %p69
      %p227 = pneg %p93
      %p228 = pneg %p90
      %p229 = pneg %p114
      %p230 = pneg %p111
      %p231 = pneg %p135
      %p232 = pneg %p132
      %p233 = pneg %p163
      %p234 = pneg %p160
      %s235 = smul.u32 2, %s21
      %p236 = scmp.lt.s32.totalorder %s20, 1
      %s237 = scalar_select %p236, %s20, 1
      %p238 = scmp.lt.s32.totalorder %s235, 1
      %s239 = scalar_select %p238, %s235, 1
      %s240 = smul.addr %s237, 2
      %s241 = sadd.s32 %s239, %s240
      %s242 = smul.addr %s241, 8
      %s243 = scalar_lea.vmem %s5, %s242
      %s244 = smul.u32 2, %s21
      %p245 = scmp.lt.s32.totalorder %s20, 1
      %s246 = scalar_select %p245, %s20, 1
      %p247 = scmp.lt.s32.totalorder %s244, 1
      %s248 = scalar_select %p247, %s244, 1
      %s249 = smul.addr %s246, 2
      %s250 = sadd.s32 %s248, %s249
      %s251 = smul.addr %s250, 4
      %s252 = scalar_lea.vmem %s0, %s251
      %s253 = smul.u32 2, %s21
      %s254 = smul.u32 2, %s21
      %p255 = scmp.lt.s32.totalorder %s20, 1
      %s256 = scalar_select %p255, %s20, 1
      %p257 = scmp.lt.s32.totalorder %s254, 1
      %s258 = scalar_select %p257, %s254, 1
      %s259 = smul.addr %s256, 2
      %s260 = sadd.s32 %s258, %s259
      %s261 = smul.addr %s260, 8
      %s262 = scalar_lea.vmem %s5, %s261
      %s263 = smul.u32 2, %s21
      %v264 = vld [vmem:[%s1] sm:$0xff]
      %v265 = vld [vmem:[%s252] sm:$0xff]
      %267 = vset.pattern.permute.xlu0 0
      %268 = vperm.xlu0 %267, %v264
      %v269 = vpop.permute.xlu0 %268
      %v272 = vlaneseq
      %v273 = vshrl.u32 %v272, 7
      %v274 = vsub.s32 0, %v273
      %v275 = vrot.slane %v265, %v274
      %v276 = vlaneseq
      %v277 = vshrl.u32 %v276, 7
      %v278 = vsub.s32 4, %v277
      %v279 = vrot.slane %v265, %v278
      %v282 = vlaneseq
      %v283 = vshrl.u32 %v282, 7
      %v284 = vsub.s32 0, %v283
      %v285 = vrot.slane %v275, %v284
      %v286 = vlaneseq
      %v287 = vshrl.u32 %v286, 7
      %v288 = vsub.s32 0, %v287
      %v289 = vrot.slane %v279, %v288
      %v290 = vmul.f32 %v269, %v285
      %v291 = vmul.f32 %v269, %v289
      %292 = vset.pattern.permute.xlu0 1
      %293 = vperm.xlu0 %292, %v264
      %v294 = vpop.permute.xlu0 %293
      %v296 = vlaneseq
      %v297 = vshrl.u32 %v296, 7
      %v298 = vsub.s32 1, %v297
      %v299 = vrot.slane %v265, %v298
      %v300 = vlaneseq
      %v301 = vshrl.u32 %v300, 7
      %v302 = vsub.s32 5, %v301
      %v303 = vrot.slane %v265, %v302
      %v306 = vlaneseq
      %v307 = vshrl.u32 %v306, 7
      %v308 = vsub.s32 1, %v307
      %v309 = vrot.slane %v299, %v308
      %v310 = vlaneseq
      %v311 = vshrl.u32 %v310, 7
      %v312 = vsub.s32 1, %v311
      %v313 = vrot.slane %v303, %v312
      %v314 = vmul.f32 %v294, %v309
      %v315 = vmul.f32 %v294, %v313
      %v316 = vadd.f32 %v290, %v314
      %v317 = vadd.f32 %v291, %v315
      %318 = vset.pattern.permute.xlu0 2
      %319 = vperm.xlu0 %318, %v264
      %v320 = vpop.permute.xlu0 %319
      %v322 = vlaneseq
      %v323 = vshrl.u32 %v322, 7
      %v324 = vsub.s32 2, %v323
      %v325 = vrot.slane %v265, %v324
      %v326 = vlaneseq
      %v327 = vshrl.u32 %v326, 7
      %v328 = vsub.s32 6, %v327
      %v329 = vrot.slane %v265, %v328
      %v332 = vlaneseq
      %v333 = vshrl.u32 %v332, 7
      %v334 = vsub.s32 2, %v333
      %v335 = vrot.slane %v325, %v334
      %v336 = vlaneseq
      %v337 = vshrl.u32 %v336, 7
      %v338 = vsub.s32 2, %v337
      %v339 = vrot.slane %v329, %v338
      %v340 = vmul.f32 %v320, %v335
      %v341 = vmul.f32 %v320, %v339
      %v342 = vadd.f32 %v316, %v340
      %v343 = vadd.f32 %v317, %v341
      %344 = vset.pattern.permute.xlu0 3
      %345 = vperm.xlu0 %344, %v264
      %v346 = vpop.permute.xlu0 %345
      %v348 = vlaneseq
      %v349 = vshrl.u32 %v348, 7
      %v350 = vsub.s32 3, %v349
      %v351 = vrot.slane %v265, %v350
      %v352 = vlaneseq
      %v353 = vshrl.u32 %v352, 7
      %v354 = vsub.s32 7, %v353
      %v355 = vrot.slane %v265, %v354
      %v358 = vlaneseq
      %v359 = vshrl.u32 %v358, 7
      %v360 = vsub.s32 3, %v359
      %v361 = vrot.slane %v351, %v360
      %v362 = vlaneseq
      %v363 = vshrl.u32 %v362, 7
      %v364 = vsub.s32 3, %v363
      %v365 = vrot.slane %v355, %v364
      %v366 = vmul.f32 %v346, %v361
      %v367 = vmul.f32 %v346, %v365
      %v368 = vadd.f32 %v342, %v366
      %v369 = vadd.f32 %v343, %v367
      %v370 = vld [vmem:[%s2] sm:$0xff]
      %372 = vset.pattern.permute.xlu0 0
      %373 = vperm.xlu0 %372, %v370
      %v374 = vpop.permute.xlu0 %373
      %v376 = vmul.f32 %v368, %v374
      %v377 = vmul.f32 %v369, %v374
      %v378 = vld [vmem:[%s3] sm:$0xff]
      %380 = vset.pattern.permute.xlu0 0
      %381 = vperm.xlu0 %380, %v378
      %v382 = vpop.permute.xlu0 %381
      %v384 = vadd.f32 %v376, %v382
      %v385 = vadd.f32 %v377, %v382
      %v386 = vld [vmem:[%s4] sm:$0xff]
      %388 = vset.pattern.permute.xlu0 0
      %389 = vperm.xlu0 %388, %v386
      %v390 = vpop.permute.xlu0 %389
      %v392 = vmax.f32 %v384, %v390
      %v393 = vmax.f32 %v385, %v390
      %394 = vst [vmem:[%s262] sm:$0xff] %v392
      %395 = vst [vmem:[%s262 + $0x8] sm:$0xff] %v393
      %s396 = smul.u32 2, %s21
      %p397 = scmp.lt.s32.totalorder %s20, 1
      %s398 = scalar_select %p397, %s20, 1
      %p399 = scmp.lt.s32.totalorder %s396, 1
      %s400 = scalar_select %p399, %s396, 1
      %s401 = smul.addr %s398, 2
      %s402 = sadd.s32 %s400, %s401
      %s403 = smul.addr %s402, 8
      %s404 = scalar_lea.vmem %s5, %s403
      // Predicated region
      $region41: #{naive_ppm_forward.3} parent=39 // pred_check
        %p405 = pneg %p160
      $region42: #{naive_ppm_forward.3} parent=39 // pred_check_branch
        %407 = sbr.rel (%p405) target = $region44
      $region43: #{naive_ppm_forward.3} parent=39 // pred_region
        %s408 = smul.u32 2, %s21
      $region44: #{naive_ppm_forward.3} parent=39 // pred_fallthru
        _
    $region40: #{naive_ppm_forward.3} parent=5 // pred_fallthru
      _
    %p409 = scmp.le.s32.totalorder 2, %s11
    // Predicated region
    $region45: #{naive_ppm_forward.3} parent=5 // pred_check
      %p410 = pneg %p409
    $region46: #{naive_ppm_forward.3} parent=5 // pred_check_branch
      %412 = sbr.rel (%p410) target = $region48
    $region47: #{naive_ppm_forward.3} parent=5 // pred_region
      %s413 = ssub.s32 %s11, 2
      // Predicated region
      $region49: #{naive_ppm_forward.3} parent=47 // pred_check
        %p414 = pneg %p166
      $region50: #{naive_ppm_forward.3} parent=47 // pred_check_branch
        %416 = sbr.rel (%p414) target = $region52
      $region51: #{naive_ppm_forward.3} parent=47 // pred_region
        %s417 = smul.u32 2, %s23
        %p418 = scmp.lt.s32.totalorder %s22, 1
        %s419 = scalar_select %p418, %s22, 1
        %p420 = scmp.lt.s32.totalorder %s417, 1
        %s421 = scalar_select %p420, %s417, 1
        %s422 = smul.addr %s419, 2
        %s423 = sadd.s32 %s421, %s422
        %s424 = smul.addr %s423, 8
        %s425 = scalar_lea.vmem %s5, %s424
      $region52: #{naive_ppm_forward.3} parent=47 // pred_fallthru
        _
    $region48: #{naive_ppm_forward.3} parent=5 // pred_fallthru
      _
  $region6: #{naive_ppm_forward.3} parent=0 // loop_footer
    %s15 = sadd.s32 1, %s11
  $region7: #{naive_ppm_forward.3} parent=0 // loop_footer_branch
    %10 = sbr.rel target = $region3
  $region8: #{naive_ppm_forward.3} parent=0 // loop_exit
    _

</llo_original>
